<compile_context>
chip_gen: v6e
topology: v6e:2x2x1
jax: 0.10.0
libtpu: 0.0.40
codegen_flags: <defaults>
</compile_context>

<pallas_src>
import functools

import numpy as np
import jax
import jax.numpy as jnp
from jax.experimental import pallas as pl
from jax.experimental.pallas import tpu as pltpu


def _round_up(x, m):
    return (x + m - 1) // m * m


# --------------------------------------------------------------------------------------
# Fused MLP Pallas kernel:  y = relu(x @ W1 + b1) @ W2 + b2, tiled over the hidden dim.
# bf16 weights/activations on the MXU, f32 accumulation directly in the output block.
# --------------------------------------------------------------------------------------

def _mlp_kernel(x_ref, w1_ref, b1_ref, w2_ref, b2_ref, o_ref):
    h = pl.program_id(0)

    @pl.when(h == 0)
    def _():
        # Output block is resident across the (single, "arbitrary") hidden axis:
        # initialize it with the fc2 bias, then accumulate partial products into it.
        o_ref[...] = jnp.broadcast_to(b2_ref[...], o_ref.shape)

    hid = jnp.dot(x_ref[...], w1_ref[...], preferred_element_type=jnp.float32)
    hid = jnp.maximum(hid + b1_ref[...], 0.0).astype(jnp.bfloat16)
    o_ref[...] += jnp.dot(hid, w2_ref[...], preferred_element_type=jnp.float32)


def pad_mlp_params(p, *, th_max=1792):
    """Pad + cast an MLP's parameters ONCE (weights -> bf16, biases stay f32)."""
    K, H = p["w1"].shape
    _, N = p["w2"].shape
    Kp = _round_up(K, 128)
    Np = _round_up(N, 128)
    TH = min(th_max, _round_up(H, 128))
    Hp = _round_up(_round_up(H, 128), TH)
    arrays = {
        "w1": jnp.pad(p["w1"], ((0, Kp - K), (0, Hp - H))).astype(jnp.bfloat16),
        "b1": jnp.pad(p["b1"], (0, Hp - H)).reshape(1, Hp).astype(jnp.float32),
        "w2": jnp.pad(p["w2"], ((0, Hp - H), (0, Np - N))).astype(jnp.bfloat16),
        "b2": jnp.pad(p["b2"], (0, Np - N)).reshape(1, Np).astype(jnp.float32),
    }
    meta = {"K": K, "N": N, "Kp": Kp, "Hp": Hp, "Np": Np, "TH": TH}
    return arrays, meta


def mlp_pallas(x, arrays, meta):
    """x: (M, K) f32/bf16, pre-padded bf16 weights -> (M, N) f32."""
    M, K = x.shape
    assert K == meta["K"], (K, meta["K"])
    Kp, Hp, Np, TH = meta["Kp"], meta["Hp"], meta["Np"], meta["TH"]
    Mp = _round_up(max(M, 1), 8)
    xp = jnp.pad(x.astype(jnp.bfloat16), ((0, Mp - M), (0, Kp - K)))

    out = pl.pallas_call(
        _mlp_kernel,
        out_shape=jax.ShapeDtypeStruct((Mp, Np), jnp.float32),
        grid_spec=pltpu.PrefetchScalarGridSpec(
            num_scalar_prefetch=0,
            grid=(Hp // TH,),
            in_specs=[
                pl.BlockSpec((Mp, Kp), lambda h: (0, 0)),
                pl.BlockSpec((Kp, TH), lambda h: (0, h)),
                pl.BlockSpec((1, TH), lambda h: (0, h)),
                pl.BlockSpec((TH, Np), lambda h: (h, 0)),
                pl.BlockSpec((1, Np), lambda h: (0, 0)),
            ],
            out_specs=pl.BlockSpec((Mp, Np), lambda h: (0, 0)),
        ),
        compiler_params=pltpu.CompilerParams(
            dimension_semantics=("arbitrary",),
            vmem_limit_bytes=48 * 1024 * 1024,
        ),
    )(xp, arrays["w1"], arrays["b1"], arrays["w2"], arrays["b2"])
    return out[:M, :meta["N"]]


def mlp_ref_bf16(p, x):
    """Pure-JAX reference that mirrors the kernel's bf16/f32 numerics."""
    xb = x.astype(jnp.bfloat16)
    w1b = p["w1"].astype(jnp.bfloat16)
    w2b = p["w2"].astype(jnp.bfloat16)
    hid = jnp.maximum(
        jnp.dot(xb, w1b, preferred_element_type=jnp.float32) + p["b1"], 0.0)
    return jnp.dot(hid.astype(jnp.bfloat16), w2b,
                   preferred_element_type=jnp.float32) + p["b2"]


# --------------------------------------------------------------------------------------
# Parameter init (deterministic, PyTorch nn.Linear-style fan_in uniform)
# --------------------------------------------------------------------------------------

def _init_linear(key, fan_in, fan_out):
    kw, kb = jax.random.split(key)
    bound = 1.0 / (fan_in ** 0.5)
    w = jax.random.uniform(kw, (fan_in, fan_out), jnp.float32, -bound, bound)
    b = jax.random.uniform(kb, (fan_out,), jnp.float32, -bound, bound)
    return w, b


def _init_mlp(key, d_in, hidden, d_out):
    k1, k2 = jax.random.split(key)
    w1, b1 = _init_linear(k1, d_in, hidden)
    w2, b2 = _init_linear(k2, hidden, d_out)
    return {"w1": w1, "b1": b1, "w2": w2, "b2": b2}


def init_params(key, cfg):
    ks = jax.random.split(key, 6)
    V, VO = cfg["VISUAL_DIM"], cfg["VISUAL_OUT"]
    T, TO = cfg["TEXT_DIM"], cfg["TEXT_OUT"]
    D = cfg["DIM_STATE"]
    return {
        "mlp_v":   _init_mlp(ks[0], V, 4 * V, VO),                  # MLP(VISUAL_DIM, VISUAL_OUT)
        "mlp_t":   _init_mlp(ks[1], T, 4 * T, TO),                  # MLP(TEXT_DIM, TEXT_OUT)
        "mlp_pre": _init_mlp(ks[2], VO * 7, 4 * VO * 7, D),         # MLP(VISUAL_OUT*7, DIM_STATE)
        "proj":    _init_mlp(ks[3], D * 2, 4 * D * 2, 1),           # MLP(DIM_STATE*2, 1)  (arch='mlp')
        "mlp_vit": _init_mlp(ks[4], cfg["VIT_IN"], cfg["VIT_IN"], cfg["VIT_OUT"]),  # MLP1(1024, 512)
        "state":   jax.random.normal(ks[5], (D,), jnp.float32),     # torch.randn(DIM_STATE)
    }


def prepare_params(params):
    """Pad/cast the four heavy MLPs once; keep proj + state raw (f32, tiny, sequential)."""
    arrays, metas = {}, {}
    for name in ("mlp_v", "mlp_t", "mlp_pre", "mlp_vit"):
        a, m = pad_mlp_params(params[name])
        arrays[name] = a
        metas[name] = m
    arrays["proj"] = params["proj"]
    arrays["state"] = params["state"]
    return arrays, metas


# --------------------------------------------------------------------------------------
# Per-item forward (jitted): batched Pallas MLPs + fused XLA reductions + history loop
# --------------------------------------------------------------------------------------

def build_item_forward(metas, history_val="max"):

    @functools.partial(jax.jit, static_argnames=("step_sizes",))
    def item_forward(pa,
                     video, video_global, question, para,
                     a_texts, a_buttons,
                     paras_score, hand_score,
                     seg_mask, seg_onehot, seg_is_point,
                     *, step_sizes):
        P = para.shape[0]
        n_frames = video.shape[0]
        n_act = a_texts.shape[0]

        # --- one batched Pallas call per weight set ---------------------------------
        t_in = jnp.concatenate([para, question, a_texts], axis=0)
        t_out = mlp_pallas(t_in, pa["mlp_t"], metas["mlp_t"])
        para_f = t_out[:P]                       # (P, TEXT_OUT)
        question_f = t_out[P:P + 1]              # (1, TEXT_OUT)
        a_texts_f = t_out[P + 1:]                # (n_act, TEXT_OUT)

        v_in = jnp.concatenate([video, a_buttons], axis=0)
        v_out = mlp_pallas(v_in, pa["mlp_vit"], metas["mlp_vit"])
        video_f = v_out[:n_frames]                                 # (T, VIT_OUT)
        a_buttons_f = v_out[n_frames:].reshape(n_act, -1)          # (n_act, nb*VIT_OUT)

        vg_f = mlp_pallas(video_global, pa["mlp_v"], metas["mlp_v"])  # (P, VISUAL_OUT)

        # --- softmax-weighted reductions: plain fused XLA ops (no per-segment kernels)
        score = jax.nn.softmax(paras_score, axis=0)                # (P,)
        masked = jnp.where(seg_mask > 0, hand_score[None, :], -1e30)
        w_soft = jax.nn.softmax(masked, axis=1)                    # per-segment softmax
        seg_w = jnp.where(seg_is_point > 0, seg_onehot, w_soft)    # (P, T)
        video_seg = score @ (seg_w @ video_f)                      # (VIT_OUT,)
        video_seg_global = score @ vg_f                            # (VISUAL_OUT,)
        text_seg = score @ para_f                                  # (TEXT_OUT,)

        # --- mlp_pre batched over ALL steps x actions --------------------------------
        qa = question_f + a_texts_f                                # (n_act, TEXT_OUT)
        inputs_all = jnp.concatenate([
            jnp.broadcast_to(video_seg, (n_act, video_seg.shape[0])),
            jnp.broadcast_to(video_seg_global, (n_act, video_seg_global.shape[0])),
            jnp.broadcast_to(text_seg, (n_act, text_seg.shape[0])),
            qa,
            a_buttons_f,
        ], axis=1)                                                 # (n_act, VISUAL_OUT*7)
        pre_all = mlp_pallas(inputs_all, pa["mlp_pre"], metas["mlp_pre"])  # (n_act, D)

        # --- sequential proj / history loop (tiny MLP, N=1 output -> fused XLA on VPU)
        pw1, pb1 = pa["proj"]["w1"], pa["proj"]["b1"]
        pw2, pb2 = pa["proj"]["w2"], pa["proj"]["b2"]
        state = pa["state"]
        logits_steps = []
        off = 0
        for A in step_sizes:                                       # arch == 'mlp'
            inputs = pre_all[off:off + A]
            off += A
            states = jnp.concatenate(
                [inputs, jnp.broadcast_to(state, inputs.shape)], axis=1)
            hid = jnp.maximum(states @ pw1 + pb1, 0.0)
            logits = (hid @ pw2 + pb2).reshape(-1)                 # (A,)
            logits_steps.append(logits)
            if history_val == "max":                               # eval mode
                state = inputs[jnp.argmax(logits)]
        return logits_steps

    return item_forward


# --------------------------------------------------------------------------------------
# Forward pass over a batch (eval mode, function_centric=True, arch='mlp', val='max')
# --------------------------------------------------------------------------------------

def q2a_interaction_global_forward(item_forward, param_arrays, batch, cfg):
    results = []
    for (video, video_global, script, question, para, actions, label, meta) in batch:
        # function_centric branch
        timestamps = meta["paras_timestamp"]
        P = len(timestamps)
        T = video.shape[0]

        # Host-side segment masks (timestamps are plain Python metadata).
        seg_mask = np.zeros((P, T), np.float32)
        seg_onehot = np.zeros((P, T), np.float32)
        seg_is_point = np.zeros((P, 1), np.float32)
        for r, (s0, s1) in enumerate(timestamps):
            if s0 >= s1:
                seg_onehot[r, s0] = 1.0          # matches original video[seg[0]] pick
                seg_is_point[r, 0] = 1.0
            else:
                seg_mask[r, s0:s1] = 1.0

        step_sizes = tuple(len(step) for step in actions)
        a_texts = jnp.concatenate([a["text"] for step in actions for a in step], axis=0)
        a_buttons = jnp.concatenate(
            [a["button"].reshape(-1, cfg["VIT_IN"]) for step in actions for a in step],
            axis=0)

        logits_steps = item_forward(
            param_arrays,
            video, video_global, question, para,
            a_texts, a_buttons,
            jnp.asarray(meta["paras_score"], jnp.float32),
            jnp.asarray(meta["hand_score"], jnp.float32),
            jnp.asarray(seg_mask), jnp.asarray(seg_onehot), jnp.asarray(seg_is_point),
            step_sizes=step_sizes)

        out_meta = dict(meta)
        out_meta["scores"] = list(logits_steps)
        results.append(out_meta)
    return results


# --------------------------------------------------------------------------------------
# Synthetic deterministic data
# --------------------------------------------------------------------------------------

def make_batch(key, cfg, n_items, n_paras, n_frames, n_actions, n_steps):
    batch = []
    for it in range(n_items):
        key, *ks = jax.random.split(key, 9)
        video = jax.random.normal(ks[0], (n_frames, cfg["VIT_IN"]), jnp.float32)
        video_global = jax.random.normal(ks[1], (n_paras, cfg["VISUAL_DIM"]), jnp.float32)
        script = jax.random.normal(ks[2], (5, cfg["TEXT_DIM"]), jnp.float32)
        question = jax.random.normal(ks[3], (1, cfg["TEXT_DIM"]), jnp.float32)
        para = jax.random.normal(ks[4], (n_paras, cfg["TEXT_DIM"]), jnp.float32)
        actions = []
        akey = ks[5]
        for _ in range(n_steps):
            step_actions = []
            for _ in range(n_actions):
                akey, kt, kb = jax.random.split(akey, 3)
                step_actions.append({
                    "text": jax.random.normal(kt, (1, cfg["TEXT_DIM"]), jnp.float32),
                    "button": jax.random.normal(kb, (1, cfg["VIT_IN"]), jnp.float32),
                })
            actions.append(step_actions)
        label = [0] * n_steps  # unused in eval mode
        meta = {
            "paras_score": [float(v) for v in jax.random.normal(ks[6], (n_paras,))],
            "paras_timestamp": [(0, 3), (3, 3), (4, n_frames)],   # covers both branches
            "sents_score": [0.0] * 5,
            "sents_timestamp": [(0, 1)] * 5,
            "hand_score": jax.random.normal(ks[7], (n_frames,), jnp.float32),
            "item": it,
        }
        batch.append((video, video_global, script, question, para, actions, label, meta))
    return batch


# --------------------------------------------------------------------------------------

if __name__ == "__main__":
    cfg = dict(
        VISUAL_DIM=128, VISUAL_OUT=256,
        TEXT_DIM=128, TEXT_OUT=256,
        DIM_STATE=128,
        VIT_IN=1024, VIT_OUT=512,       # mlp_vit = MLP1(1024, 512) per the module
        ARCH="mlp", HISTORY_VAL="max", FUNCTION_CENTRIC=True,
    )

    root = jax.random.PRNGKey(0)
    k_params, k_data, k_check = jax.random.split(root, 3)
    params = init_params(k_params, cfg)
    param_arrays, metas = prepare_params(params)
    item_forward = build_item_forward(metas, history_val=cfg["HISTORY_VAL"])

    # Sanity checks: fused bf16 Pallas MLP kernel vs. a bf16/f32 reference
    # (tolerance reflects the documented bf16 weight/activation cast).
    kc1, kc2 = jax.random.split(k_check)
    x_t = jax.random.normal(kc1, (5, cfg["TEXT_DIM"]), jnp.float32)
    got = mlp_pallas(x_t, param_arrays["mlp_t"], metas["mlp_t"])
    ref = mlp_ref_bf16(params["mlp_t"], x_t)
    assert jnp.allclose(got, ref, atol=2e-2, rtol=2e-2), "mlp_t Pallas kernel mismatch"

    x_p = jax.random.normal(kc2, (5, cfg["VISUAL_OUT"] * 7), jnp.float32)
    got = mlp_pallas(x_p, param_arrays["mlp_pre"], metas["mlp_pre"])   # exercises H tiling
    ref = mlp_ref_bf16(params["mlp_pre"], x_p)
    assert jnp.allclose(got, ref, atol=2e-2, rtol=2e-2), "mlp_pre Pallas kernel mismatch"

    batch = make_batch(k_data, cfg, n_items=2, n_paras=3, n_frames=8,
                       n_actions=4, n_steps=2)
    results = q2a_interaction_global_forward(item_forward, param_arrays, batch, cfg)

    # block on every produced logits vector, then convert to python lists
    jax.block_until_ready([s for meta in results for s in meta["scores"]])
    for meta in results:
        meta["scores"] = [list(map(float, s)) for s in meta["scores"]]

    print("KERNEL_OK")
</pallas_src>

<mosaic_0001>
module attributes {stable_mosaic.version = 11 : i64} {
  func.func @_mlp_kernel(%arg0: i32, %arg1: memref<8x128xbf16, #tpu.memory_space<vmem>>, %arg2: memref<128x512xbf16, #tpu.memory_space<vmem>>, %arg3: memref<1x512xf32, #tpu.memory_space<vmem>>, %arg4: memref<512x256xbf16, #tpu.memory_space<vmem>>, %arg5: memref<1x256xf32, #tpu.memory_space<vmem>>, %arg6: memref<8x256xf32, #tpu.memory_space<vmem>>) attributes {dimension_semantics = [#tpu.dimension_semantics<arbitrary>], iteration_bounds = array<i64: 1>, scalar_prefetch = 0 : i64, scratch_operands = 0 : i64, tpu.core_type = #tpu.core_type<tc>, window_params = [{pipeline_mode = #tpu.pipeline_mode<synchronous>, transform_indices = @transform_0, window_bounds = array<i64: 8, 128>}, {transform_indices = @transform_1, window_bounds = array<i64: 128, 512>}, {transform_indices = @transform_2, window_bounds = array<i64: 1, 512>}, {transform_indices = @transform_3, window_bounds = array<i64: 512, 256>}, {pipeline_mode = #tpu.pipeline_mode<synchronous>, transform_indices = @transform_4, window_bounds = array<i64: 1, 256>}, {pipeline_mode = #tpu.pipeline_mode<synchronous>, transform_indices = @transform_5, window_bounds = array<i64: 8, 256>}]} {
    %c0_i32 = arith.constant 0 : i32
    %0 = arith.cmpi eq, %arg0, %c0_i32 : i32
    %1 = arith.extui %0 : i1 to i32
    %c0_i32_0 = arith.constant 0 : i32
    %2 = arith.cmpi ne, %1, %c0_i32_0 : i32
    scf.if %2 {
      %c0_14 = arith.constant 0 : index
      %c0_15 = arith.constant 0 : index
      %17 = vector.load %arg5[%c0_14, %c0_15] : memref<1x256xf32, #tpu.memory_space<vmem>>, vector<1x256xf32>
      %18 = vector.shape_cast %17 : vector<1x256xf32> to vector<1x256xf32>
      %19 = vector.broadcast %18 : vector<1x256xf32> to vector<8x256xf32>
      %c0_16 = arith.constant 0 : index
      %c0_17 = arith.constant 0 : index
      %20 = vector.load %arg6[%c0_16, %c0_17] : memref<8x256xf32, #tpu.memory_space<vmem>>, vector<8x256xf32>
      tpu.vector_store %arg6[%c0_16, %c0_17], %19 {strides = array<i32>} : memref<8x256xf32, #tpu.memory_space<vmem>>, vector<8x256xf32>,
    } else {
    }
    %c0 = arith.constant 0 : index
    %c0_1 = arith.constant 0 : index
    %3 = vector.load %arg1[%c0, %c0_1] : memref<8x128xbf16, #tpu.memory_space<vmem>>, vector<8x128xbf16>
    %c0_2 = arith.constant 0 : index
    %c0_3 = arith.constant 0 : index
    %4 = vector.load %arg2[%c0_2, %c0_3] : memref<128x512xbf16, #tpu.memory_space<vmem>>, vector<128x512xbf16>
    %cst = arith.constant dense<0.000000e+00> : vector<8x512xf32>
    %5 = tpu.matmul %3, %4, %cst {dimension_numbers = #tpu.dot_dimension_numbers<[1], [0], [0], [1], [0, 0, 1, 1], [], []>} : vector<8x128xbf16>, vector<128x512xbf16>, vector<8x512xf32> -> vector<8x512xf32>
    %c0_4 = arith.constant 0 : index
    %c0_5 = arith.constant 0 : index
    %6 = vector.load %arg3[%c0_4, %c0_5] : memref<1x512xf32, #tpu.memory_space<vmem>>, vector<1x512xf32>
    %7 = vector.broadcast %6 : vector<1x512xf32> to vector<8x512xf32>
    %8 = arith.addf %5, %7 : vector<8x512xf32>
    %cst_6 = arith.constant 0.000000e+00 : f32
    %9 = vector.broadcast %cst_6 : f32 to vector<8x512xf32>
    %10 = arith.maximumf %8, %9 : vector<8x512xf32>
    %11 = arith.truncf %10 : vector<8x512xf32> to vector<8x512xbf16>
    %c0_7 = arith.constant 0 : index
    %c0_8 = arith.constant 0 : index
    %12 = vector.load %arg6[%c0_7, %c0_8] : memref<8x256xf32, #tpu.memory_space<vmem>>, vector<8x256xf32>
    %c0_9 = arith.constant 0 : index
    %c0_10 = arith.constant 0 : index
    %13 = vector.load %arg4[%c0_9, %c0_10] : memref<512x256xbf16, #tpu.memory_space<vmem>>, vector<512x256xbf16>
    %cst_11 = arith.constant dense<0.000000e+00> : vector<8x256xf32>
    %14 = tpu.matmul %11, %13, %cst_11 {dimension_numbers = #tpu.dot_dimension_numbers<[1], [0], [0], [1], [0, 0, 1, 1], [], []>} : vector<8x512xbf16>, vector<512x256xbf16>, vector<8x256xf32> -> vector<8x256xf32>
    %15 = arith.addf %12, %14 : vector<8x256xf32>
    %c0_12 = arith.constant 0 : index
    %c0_13 = arith.constant 0 : index
    %16 = vector.load %arg6[%c0_12, %c0_13] : memref<8x256xf32, #tpu.memory_space<vmem>>, vector<8x256xf32>
    tpu.vector_store %arg6[%c0_12, %c0_13], %15 {strides = array<i32>} : memref<8x256xf32, #tpu.memory_space<vmem>>, vector<8x256xf32>,
    return
  }
  func.func @transform_0(%arg0: i32) -> (i32, i32) {
    %c0_i32 = arith.constant 0 : i32
    %c0_i32_0 = arith.constant 0 : i32
    %c0_i32_1 = arith.constant 0 : i32
    return %c0_i32, %c0_i32_0 : i32, i32
  }
  func.func @transform_1(%arg0: i32) -> (i32, i32) {
    %c0_i32 = arith.constant 0 : i32
    %c0_i32_0 = arith.constant 0 : i32
    return %c0_i32, %arg0 : i32, i32
  }
  func.func @transform_2(%arg0: i32) -> (i32, i32) {
    %c0_i32 = arith.constant 0 : i32
    %c0_i32_0 = arith.constant 0 : i32
    return %c0_i32, %arg0 : i32, i32
  }
  func.func @transform_3(%arg0: i32) -> (i32, i32) {
    %c0_i32 = arith.constant 0 : i32
    %c0_i32_0 = arith.constant 0 : i32
    return %arg0, %c0_i32 : i32, i32
  }
  func.func @transform_4(%arg0: i32) -> (i32, i32) {
    %c0_i32 = arith.constant 0 : i32
    %c0_i32_0 = arith.constant 0 : i32
    %c0_i32_1 = arith.constant 0 : i32
    return %c0_i32, %c0_i32_0 : i32, i32
  }
  func.func @transform_5(%arg0: i32) -> (i32, i32) {
    %c0_i32 = arith.constant 0 : i32
    %c0_i32_0 = arith.constant 0 : i32
    %c0_i32_1 = arith.constant 0 : i32
    return %c0_i32, %c0_i32_0 : i32, i32
  }
}

</mosaic_0001>

<llo_original>
// kernel: tpu_custom_call.1
$region0: #{tpu_custom_call.1}
  #allocation0 [shape = 'u32[]', space=smem, size = 0x4, offset = 0x4, fixed_abs, tag = 'smem constant byte address 0x4 - core index']
  #allocation1 [shape = 'u32[144,128]{1,0:T(1,128)}', space=vmem, size = 0x12000, scoped, tag = 'internal scratch']
  %s0 = inlined_call_operand.hbm [shape: bf16[8,128], index: 0, kind: input, shape index: {}]
  %s1 = inlined_call_operand.hbm [shape: bf16[128,512], index: 1, kind: input, shape index: {}]
  %s2 = inlined_call_operand.hbm [shape: f32[1,512], index: 2, kind: input, shape index: {}]
  %s3 = inlined_call_operand.hbm [shape: bf16[512,256], index: 3, kind: input, shape index: {}]
  %s4 = inlined_call_operand.vmem [shape: f32[1,256], index: 4, kind: input, shape index: {}]
  %s5 = inlined_call_operand.hbm [shape: f32[8,256], index: 5, kind: output, shape index: {}]
  %s6 = sld [smem:[#allocation0]]
  $region50: #{tpu_custom_call.1} parent=0
    _
  %s8 = ssub.s32 1, %s6
  %s9 = scalar_select 0, %s8, %s6
  $region1: #{tpu_custom_call.1} parent=0
    #allocation2 [shape = 'u8[2048]{0}', space=vmem, size = 0x800, scoped, tag = 'input window, operand 0, single buffered']
    #allocation3 [shape = 's32[1]{0}', space=sflag, size = 0x4, scoped, tag = 'scoped memory for tpu_custom_call.1']
    #allocation4 [shape = 's32[1]{0}', space=sflag, size = 0x4, scoped, tag = 'scoped memory for tpu_custom_call.1']
    #allocation5 [shape = 'u8[131072]{0}', space=vmem, size = 0x20000, scoped, tag = 'input window, operand 1, single buffered']
    #allocation6 [shape = 's32[1]{0}', space=sflag, size = 0x4, scoped, tag = 'scoped memory for tpu_custom_call.1']
    #allocation7 [shape = 'u8[2048]{0}', space=vmem, size = 0x800, scoped, tag = 'input window, operand 2, single buffered']
    #allocation8 [shape = 'u8[262144]{0}', space=vmem, size = 0x40000, scoped, tag = 'input window, operand 3, single buffered']
    #allocation9 [shape = 's32[1]{0}', space=sflag, size = 0x4, scoped, tag = 'scoped memory for tpu_custom_call.1']
    #allocation10 [shape = 'u8[8192]{0}', space=vmem, size = 0x2000, scoped, tag = 'output window, operand 0, single buffered']
    %10 = vsyncpa [#allocation3], 0
    %11 = vsyncpa [#allocation6], 0
    %12 = vsyncpa [#allocation9], 0
    %13 = vsyncpa [#allocation4], 0
    // Predicated region
    $region2: #{tpu_custom_call.1} parent=1 // pred_check
      _
    $region3: #{tpu_custom_call.1} parent=1 // pred_check_branch
      %15 = sbr.rel (0) target = $region5
    $region4: #{tpu_custom_call.1} parent=1 // pred_region
      %s17 = ssub.s32 64, 64
      %18 = vsyncadd [#allocation3], %s17
      %s20 = sshll.u32 [#allocation2], 4
      %s21 = int_to_ptr.vmem [resolvable:$true] %s20
      %23 = dma.hbm_to_vmem [thread:$0]  %s0, 64, %s21, [#allocation3]
    $region5: #{tpu_custom_call.1} parent=1 // pred_fallthru
      _
    // Predicated region
    $region6: #{tpu_custom_call.1} parent=1 // pred_check
      _
    $region7: #{tpu_custom_call.1} parent=1 // pred_check_branch
      %25 = sbr.rel (0) target = $region9
    $region8: #{tpu_custom_call.1} parent=1 // pred_region
      %s27 = ssub.s32 4096, 4096
      %28 = vsyncadd [#allocation6], %s27
      %s29 = sshll.u32 [#allocation5], 4
      %s30 = int_to_ptr.vmem [resolvable:$true] %s29
      %35 = dma.hbm_to_vmem [thread:$0]  %s1, 4096, %s30, [#allocation6], 256, 256, 16
    $region9: #{tpu_custom_call.1} parent=1 // pred_fallthru
      _
    // Predicated region
    $region10: #{tpu_custom_call.1} parent=1 // pred_check
      _
    $region11: #{tpu_custom_call.1} parent=1 // pred_check_branch
      %37 = sbr.rel (0) target = $region13
    $region12: #{tpu_custom_call.1} parent=1 // pred_region
      %s39 = ssub.s32 64, 64
      %40 = vsyncadd [#allocation6], %s39
      %s42 = sshll.u32 [#allocation7], 4
      %s43 = int_to_ptr.vmem [resolvable:$true] %s42
      %45 = dma.hbm_to_vmem [thread:$0]  %s2, 64, %s43, [#allocation6]
    $region13: #{tpu_custom_call.1} parent=1 // pred_fallthru
      _
    // Predicated region
    $region14: #{tpu_custom_call.1} parent=1 // pred_check
      _
    $region15: #{tpu_custom_call.1} parent=1 // pred_check_branch
      %47 = sbr.rel (0) target = $region17
    $region16: #{tpu_custom_call.1} parent=1 // pred_region
      %s49 = ssub.s32 8192, 8192
      %50 = vsyncadd [#allocation9], %s49
      %s51 = sshll.u32 [#allocation8], 4
      %s52 = int_to_ptr.vmem [resolvable:$true] %s51
      %57 = dma.hbm_to_vmem [thread:$0]  %s3, 8192, %s52, [#allocation9], 128, 128, 8
    $region17: #{tpu_custom_call.1} parent=1 // pred_fallthru
      _
    // Predicated region
    $region18: #{tpu_custom_call.1} parent=1 // pred_check
      _
    $region19: #{tpu_custom_call.1} parent=1 // pred_check_branch
      %59 = sbr.rel (0) target = $region21
    $region20: #{tpu_custom_call.1} parent=1 // pred_region
      _
    $region21: #{tpu_custom_call.1} parent=1 // pred_fallthru
      _
    // Predicated region
    $region22: #{tpu_custom_call.1} parent=1 // pred_check
      _
    $region23: #{tpu_custom_call.1} parent=1 // pred_check_branch
      %61 = sbr.rel (0) target = $region25
    $region24: #{tpu_custom_call.1} parent=1 // pred_region
      %62 = dma.done [#allocation3], 64
    $region25: #{tpu_custom_call.1} parent=1 // pred_fallthru
      _
    // Predicated region
    $region26: #{tpu_custom_call.1} parent=1 // pred_check
      _
    $region27: #{tpu_custom_call.1} parent=1 // pred_check_branch
      %64 = sbr.rel (0) target = $region29
    $region28: #{tpu_custom_call.1} parent=1 // pred_region
      %65 = dma.done [#allocation6], 4096
    $region29: #{tpu_custom_call.1} parent=1 // pred_fallthru
      _
    // Predicated region
    $region30: #{tpu_custom_call.1} parent=1 // pred_check
      _
    $region31: #{tpu_custom_call.1} parent=1 // pred_check_branch
      %67 = sbr.rel (0) target = $region33
    $region32: #{tpu_custom_call.1} parent=1 // pred_region
      %68 = dma.done [#allocation6], 64
    $region33: #{tpu_custom_call.1} parent=1 // pred_fallthru
      _
    // Predicated region
    $region34: #{tpu_custom_call.1} parent=1 // pred_check
      _
    $region35: #{tpu_custom_call.1} parent=1 // pred_check_branch
      %70 = sbr.rel (0) target = $region37
    $region36: #{tpu_custom_call.1} parent=1 // pred_region
      %71 = dma.done [#allocation9], 8192
    $region37: #{tpu_custom_call.1} parent=1 // pred_fallthru
      _
    %p73 = scmp.eq.s32.totalorder 0, 0
    // Predicated region
    $region38: #{tpu_custom_call.1} parent=1 // pred_check
      %p74 = pneg %p73
    $region39: #{tpu_custom_call.1} parent=1 // pred_check_branch
      %76 = sbr.rel (%p74) target = $region41
    $region40: #{tpu_custom_call.1} parent=1 // pred_region
      %v77 = vld [vmem:[%s4] sm:$0x3]
      %v79 = vlaneseq
      %v80 = vshrl.u32 %v79, 7
      %v81 = vsub.s32 0, %v80
      %v82 = vrot.slane %v77, %v81
      %v83 = vlaneseq
      %v84 = vshrl.u32 %v83, 7
      %v85 = vsub.s32 1, %v84
      %v86 = vrot.slane %v77, %v85
      %89 = vst [vmem:[#allocation10] sm:$0xff] %v82
      %90 = vst [vmem:[#allocation10 + $0x8] sm:$0xff] %v86
    $region41: #{tpu_custom_call.1} parent=1 // pred_fallthru
      _
    %v91 = vld [vmem:[#allocation2] sm:$0xf]
    %v92 = vld [vmem:[#allocation5] sm:$0xff]
    %v93 = vld [vmem:[#allocation5 + $0x8] sm:$0xff]
    %v94 = vld [vmem:[#allocation5 + $0x10] sm:$0xff]
    %v95 = vld [vmem:[#allocation5 + $0x18] sm:$0xff]
    %v96 = vld [vmem:[#allocation5 + $0x20] sm:$0xff]
    %v97 = vld [vmem:[#allocation5 + $0x28] sm:$0xff]
    %v98 = vld [vmem:[#allocation5 + $0x30] sm:$0xff]
    %v99 = vld [vmem:[#allocation5 + $0x38] sm:$0xff]
    %v100 = vld [vmem:[#allocation5 + $0x40] sm:$0xff]
    %v101 = vld [vmem:[#allocation5 + $0x48] sm:$0xff]
    %v102 = vld [vmem:[#allocation5 + $0x50] sm:$0xff]
    %v103 = vld [vmem:[#allocation5 + $0x58] sm:$0xff]
    %v104 = vld [vmem:[#allocation5 + $0x60] sm:$0xff]
    %v105 = vld [vmem:[#allocation5 + $0x68] sm:$0xff]
    %v106 = vld [vmem:[#allocation5 + $0x70] sm:$0xff]
    %v107 = vld [vmem:[#allocation5 + $0x78] sm:$0xff]
    %v108 = vld [vmem:[#allocation5 + $0x80] sm:$0xff]
    %v109 = vld [vmem:[#allocation5 + $0x88] sm:$0xff]
    %v110 = vld [vmem:[#allocation5 + $0x90] sm:$0xff]
    %v111 = vld [vmem:[#allocation5 + $0x98] sm:$0xff]
    %v112 = vld [vmem:[#allocation5 + $0xa0] sm:$0xff]
    %v113 = vld [vmem:[#allocation5 + $0xa8] sm:$0xff]
    %v114 = vld [vmem:[#allocation5 + $0xb0] sm:$0xff]
    %v115 = vld [vmem:[#allocation5 + $0xb8] sm:$0xff]
    %v116 = vld [vmem:[#allocation5 + $0xc0] sm:$0xff]
    %v117 = vld [vmem:[#allocation5 + $0xc8] sm:$0xff]
    %v118 = vld [vmem:[#allocation5 + $0xd0] sm:$0xff]
    %v119 = vld [vmem:[#allocation5 + $0xd8] sm:$0xff]
    %v120 = vld [vmem:[#allocation5 + $0xe0] sm:$0xff]
    %v121 = vld [vmem:[#allocation5 + $0xe8] sm:$0xff]
    %v122 = vld [vmem:[#allocation5 + $0xf0] sm:$0xff]
    %v123 = vld [vmem:[#allocation5 + $0xf8] sm:$0xff]
    %v124 = vld [vmem:[#allocation7] sm:$0xf]
    %v126 = vlaneseq
    %v127 = vshrl.u32 %v126, 7
    %v128 = vsub.s32 0, %v127
    %v129 = vrot.slane %v124, %v128
    %v130 = vlaneseq
    %v131 = vshrl.u32 %v130, 7
    %v132 = vsub.s32 1, %v131
    %v133 = vrot.slane %v124, %v132
    %v134 = vlaneseq
    %v135 = vshrl.u32 %v134, 7
    %v136 = vsub.s32 2, %v135
    %v137 = vrot.slane %v124, %v136
    %v138 = vlaneseq
    %v139 = vshrl.u32 %v138, 7
    %v140 = vsub.s32 3, %v139
    %v141 = vrot.slane %v124, %v140
    %v178 = vunpack.c.l.b16 %v92
    %v179 = vunpack.c.h.b16 %v92
    %v180 = vunpack.c.l.b16 %v93
    %v181 = vunpack.c.h.b16 %v93
    %v182 = vunpack.c.l.b16 %v94
    %v183 = vunpack.c.h.b16 %v94
    %v184 = vunpack.c.l.b16 %v95
    %v185 = vunpack.c.h.b16 %v95
    %v186 = vunpack.c.l.b16 %v96
    %v187 = vunpack.c.h.b16 %v96
    %v188 = vunpack.c.l.b16 %v97
    %v189 = vunpack.c.h.b16 %v97
    %v190 = vunpack.c.l.b16 %v98
    %v191 = vunpack.c.h.b16 %v98
    %v192 = vunpack.c.l.b16 %v99
    %v193 = vunpack.c.h.b16 %v99
    %v194 = vunpack.c.l.b16 %v100
    %v195 = vunpack.c.h.b16 %v100
    %v196 = vunpack.c.l.b16 %v101
    %v197 = vunpack.c.h.b16 %v101
    %v198 = vunpack.c.l.b16 %v102
    %v199 = vunpack.c.h.b16 %v102
    %v200 = vunpack.c.l.b16 %v103
    %v201 = vunpack.c.h.b16 %v103
    %v202 = vunpack.c.l.b16 %v104
    %v203 = vunpack.c.h.b16 %v104
    %v204 = vunpack.c.l.b16 %v105
    %v205 = vunpack.c.h.b16 %v105
    %v206 = vunpack.c.l.b16 %v106
    %v207 = vunpack.c.h.b16 %v106
    %v208 = vunpack.c.l.b16 %v107
    %v209 = vunpack.c.h.b16 %v107
    %v210 = vunpack.c.l.b16 %v108
    %v211 = vunpack.c.h.b16 %v108
    %v212 = vunpack.c.l.b16 %v109
    %v213 = vunpack.c.h.b16 %v109
    %v214 = vunpack.c.l.b16 %v110
    %v215 = vunpack.c.h.b16 %v110
    %v216 = vunpack.c.l.b16 %v111
    %v217 = vunpack.c.h.b16 %v111
    %v218 = vunpack.c.l.b16 %v112
    %v219 = vunpack.c.h.b16 %v112
    %v220 = vunpack.c.l.b16 %v113
    %v221 = vunpack.c.h.b16 %v113
    %v222 = vunpack.c.l.b16 %v114
    %v223 = vunpack.c.h.b16 %v114
    %v224 = vunpack.c.l.b16 %v115
    %v225 = vunpack.c.h.b16 %v115
    %v226 = vunpack.c.l.b16 %v116
    %v227 = vunpack.c.h.b16 %v116
    %v228 = vunpack.c.l.b16 %v117
    %v229 = vunpack.c.h.b16 %v117
    %v230 = vunpack.c.l.b16 %v118
    %v231 = vunpack.c.h.b16 %v118
    %v232 = vunpack.c.l.b16 %v119
    %v233 = vunpack.c.h.b16 %v119
    %v234 = vunpack.c.l.b16 %v120
    %v235 = vunpack.c.h.b16 %v120
    %v236 = vunpack.c.l.b16 %v121
    %v237 = vunpack.c.h.b16 %v121
    %v238 = vunpack.c.l.b16 %v122
    %v239 = vunpack.c.h.b16 %v122
    %v240 = vunpack.c.l.b16 %v123
    %v241 = vunpack.c.h.b16 %v123
    %v242 = vpack.c.b16 %v182, %v178
    %v243 = vpack.c.b16 %v183, %v179
    %v244 = vpack.c.b16 %v184, %v180
    %v245 = vpack.c.b16 %v185, %v181
    %v246 = vpack.c.b16 %v190, %v186
    %v247 = vpack.c.b16 %v191, %v187
    %v248 = vpack.c.b16 %v192, %v188
    %v249 = vpack.c.b16 %v193, %v189
    %v250 = vpack.c.b16 %v198, %v194
    %v251 = vpack.c.b16 %v199, %v195
    %v252 = vpack.c.b16 %v200, %v196
    %v253 = vpack.c.b16 %v201, %v197
    %v254 = vpack.c.b16 %v206, %v202
    %v255 = vpack.c.b16 %v207, %v203
    %v256 = vpack.c.b16 %v208, %v204
    %v257 = vpack.c.b16 %v209, %v205
    %v258 = vpack.c.b16 %v214, %v210
    %v259 = vpack.c.b16 %v215, %v211
    %v260 = vpack.c.b16 %v216, %v212
    %v261 = vpack.c.b16 %v217, %v213
    %v262 = vpack.c.b16 %v222, %v218
    %v263 = vpack.c.b16 %v223, %v219
    %v264 = vpack.c.b16 %v224, %v220
    %v265 = vpack.c.b16 %v225, %v221
    %v266 = vpack.c.b16 %v230, %v226
    %v267 = vpack.c.b16 %v231, %v227
    %v268 = vpack.c.b16 %v232, %v228
    %v269 = vpack.c.b16 %v233, %v229
    %v270 = vpack.c.b16 %v238, %v234
    %v271 = vpack.c.b16 %v239, %v235
    %v272 = vpack.c.b16 %v240, %v236
    %v273 = vpack.c.b16 %v241, %v237
    %306 = vmatprep.subr.bf16.mxu0 %v271
    %307 = vmatpush1.bf16.msra.mxu0 %v270
    %308 = vmatprep.subr.bf16.mxu0 %v267
    %309 = vmatpush1.bf16.msra.mxu0 %v266
    %310 = vmatprep.subr.bf16.mxu0 %v263
    %311 = vmatpush1.bf16.msra.mxu0 %v262
    %312 = vmatprep.subr.bf16.mxu0 %v259
    %313 = vmatpush1.bf16.msra.mxu0 %v258
    %314 = vmatprep.subr.bf16.mxu0 %v255
    %315 = vmatpush1.bf16.msra.mxu0 %v254
    %316 = vmatprep.subr.bf16.mxu0 %v251
    %317 = vmatpush1.bf16.msra.mxu0 %v250
    %318 = vmatprep.subr.bf16.mxu0 %v247
    %319 = vmatpush1.bf16.msra.mxu0 %v246
    %320 = vmatprep.subr.bf16.mxu0 %v243
    %321 = vmatpush1.bf16.msra.mxu0 %v242
    %322 = vmatprep.subr.bf16.mxu0 0
    %323 = vmatpush2.bf16.msra.mxu0 0
    %324 = vmatprep.subr.bf16.mxu0 0
    %325 = vmatpush2.bf16.msra.mxu0 0
    %326 = vmatprep.subr.bf16.mxu0 0
    %327 = vmatpush2.bf16.msra.mxu0 0
    %328 = vmatprep.subr.bf16.mxu0 0
    %329 = vmatpush2.bf16.msra.mxu0 0
    %330 = vmatprep.subr.bf16.mxu0 0
    %331 = vmatpush2.bf16.msra.mxu0 0
    %332 = vmatprep.subr.bf16.mxu0 0
    %333 = vmatpush2.bf16.msra.mxu0 0
    %334 = vmatprep.subr.bf16.mxu0 0
    %335 = vmatpush2.bf16.msra.mxu0 0
    %336 = vmatprep.subr.bf16.mxu0 0
    %337 = vmatpush2.bf16.msra.mxu0 0
    %338 = vmatprep.mubr.bf16.mxu0 0
    %339 = vmatmul.mubr.bf16.gmra.mxu0 %v91
    %v340 = vpop.f32.mrf.mxu0
    %v341 = vadd.f32 %v129, %v340
    %v342 = vpop.f32.mrf.mxu0
    %v343 = vadd.f32 %v133, %v342
    %v344 = vpop.f32.mrf.mxu0
    %v345 = vpop.f32.mrf.mxu0
    %346 = vdwg.mxu0
    %347 = vmatprep.subr.bf16.mxu0 %v273
    %348 = vmatpush1.bf16.msra.mxu0 %v272
    %349 = vmatprep.subr.bf16.mxu0 %v269
    %350 = vmatpush1.bf16.msra.mxu0 %v268
    %351 = vmatprep.subr.bf16.mxu0 %v265
    %352 = vmatpush1.bf16.msra.mxu0 %v264
    %353 = vmatprep.subr.bf16.mxu0 %v261
    %354 = vmatpush1.bf16.msra.mxu0 %v260
    %355 = vmatprep.subr.bf16.mxu0 %v257
    %356 = vmatpush1.bf16.msra.mxu0 %v256
    %357 = vmatprep.subr.bf16.mxu0 %v253
    %358 = vmatpush1.bf16.msra.mxu0 %v252
    %359 = vmatprep.subr.bf16.mxu0 %v249
    %360 = vmatpush1.bf16.msra.mxu0 %v248
    %361 = vmatprep.subr.bf16.mxu0 %v245
    %362 = vmatpush1.bf16.msra.mxu0 %v244
    %363 = vmatprep.subr.bf16.mxu0 0
    %364 = vmatpush2.bf16.msra.mxu0 0
    %365 = vmatprep.subr.bf16.mxu0 0
    %366 = vmatpush2.bf16.msra.mxu0 0
    %367 = vmatprep.subr.bf16.mxu0 0
    %368 = vmatpush2.bf16.msra.mxu0 0
    %369 = vmatprep.subr.bf16.mxu0 0
    %370 = vmatpush2.bf16.msra.mxu0 0
    %371 = vmatprep.subr.bf16.mxu0 0
    %372 = vmatpush2.bf16.msra.mxu0 0
    %373 = vmatprep.subr.bf16.mxu0 0
    %374 = vmatpush2.bf16.msra.mxu0 0
    %375 = vmatprep.subr.bf16.mxu0 0
    %376 = vmatpush2.bf16.msra.mxu0 0
    %377 = vmatprep.subr.bf16.mxu0 0
    %378 = vmatpush2.bf16.msra.mxu0 0
    %379 = vmatprep.mubr.bf16.mxu0 0
    %380 = vmatmul.mubr.bf16.gmra.mxu0 %v91
    %v381 = vpop.f32.mrf.mxu0
    %v382 = vadd.f32 %v137, %v381
    %v383 = vpop.f32.mrf.mxu0
    %v384 = vadd.f32 %v141, %v383
    %v385 = vpop.f32.mrf.mxu0
    %v386 = vpop.f32.mrf.mxu0
    %387 = vdwg.mxu0
    %v388 = vmax.f32 %v341, 0.0
    %v389 = vmax.f32 %v343, 0.0
    %v390 = vmax.f32 %v382, 0.0
    %v391 = vmax.f32 %v384, 0.0
    %v392 = vpack.c.bf16 %v388, %v388
    %v393 = vpack.c.bf16 %v389, %v389
    %v394 = vpack.c.bf16 %v390, %v390
    %v395 = vpack.c.bf16 %v391, %v391
    %v396 = vld [vmem:[#allocation10] sm:$0xff]
    %v397 = vld [vmem:[#allocation10 + $0x8] sm:$0xff]
    %v398 = vld [vmem:[#allocation8] sm:$0xff]
    %v399 = vld [vmem:[#allocation8 + $0x8] sm:$0xff]
    %v400 = vld [vmem:[#allocation8 + $0x10] sm:$0xff]
    %v401 = vld [vmem:[#allocation8 + $0x18] sm:$0xff]
    %v402 = vld [vmem:[#allocation8 + $0x20] sm:$0xff]
    %v403 = vld [vmem:[#allocation8 + $0x28] sm:$0xff]
    %v404 = vld [vmem:[#allocation8 + $0x30] sm:$0xff]
    %v405 = vld [vmem:[#allocation8 + $0x38] sm:$0xff]
    %v406 = vld [vmem:[#allocation8 + $0x40] sm:$0xff]
    %v407 = vld [vmem:[#allocation8 + $0x48] sm:$0xff]
    %v408 = vld [vmem:[#allocation8 + $0x50] sm:$0xff]
    %v409 = vld [vmem:[#allocation8 + $0x58] sm:$0xff]
    %v410 = vld [vmem:[#allocation8 + $0x60] sm:$0xff]
    %v411 = vld [vmem:[#allocation8 + $0x68] sm:$0xff]
    %v412 = vld [vmem:[#allocation8 + $0x70] sm:$0xff]
    %v413 = vld [vmem:[#allocation8 + $0x78] sm:$0xff]
    %v414 = vld [vmem:[#allocation8 + $0x80] sm:$0xff]
    %v415 = vld [vmem:[#allocation8 + $0x88] sm:$0xff]
    %v416 = vld [vmem:[#allocation8 + $0x90] sm:$0xff]
    %v417 = vld [vmem:[#allocation8 + $0x98] sm:$0xff]
    %v418 = vld [vmem:[#allocation8 + $0xa0] sm:$0xff]
    %v419 = vld [vmem:[#allocation8 + $0xa8] sm:$0xff]
    %v420 = vld [vmem:[#allocation8 + $0xb0] sm:$0xff]
    %v421 = vld [vmem:[#allocation8 + $0xb8] sm:$0xff]
    %v422 = vld [vmem:[#allocation8 + $0xc0] sm:$0xff]
    %v423 = vld [vmem:[#allocation8 + $0xc8] sm:$0xff]
    %v424 = vld [vmem:[#allocation8 + $0xd0] sm:$0xff]
    %v425 = vld [vmem:[#allocation8 + $0xd8] sm:$0xff]
    %v426 = vld [vmem:[#allocation8 + $0xe0] sm:$0xff]
    %v427 = vld [vmem:[#allocation8 + $0xe8] sm:$0xff]
    %v428 = vld [vmem:[#allocation8 + $0xf0] sm:$0xff]
    %v429 = vld [vmem:[#allocation8 + $0xf8] sm:$0xff]
    %v430 = vld [vmem:[#allocation8 + $0x100] sm:$0xff]
    %v431 = vld [vmem:[#allocation8 + $0x108] sm:$0xff]
    %v432 = vld [vmem:[#allocation8 + $0x110] sm:$0xff]
    %v433 = vld [vmem:[#allocation8 + $0x118] sm:$0xff]
    %v434 = vld [vmem:[#allocation8 + $0x120] sm:$0xff]
    %v435 = vld [vmem:[#allocation8 + $0x128] sm:$0xff]
    %v436 = vld [vmem:[#allocation8 + $0x130] sm:$0xff]
    %v437 = vld [vmem:[#allocation8 + $0x138] sm:$0xff]
    %v438 = vld [vmem:[#allocation8 + $0x140] sm:$0xff]
    %v439 = vld [vmem:[#allocation8 + $0x148] sm:$0xff]
    %v440 = vld [vmem:[#allocation8 + $0x150] sm:$0xff]
    %v441 = vld [vmem:[#allocation8 + $0x158] sm:$0xff]
    %v442 = vld [vmem:[#allocation8 + $0x160] sm:$0xff]
    %v443 = vld [vmem:[#allocation8 + $0x168] sm:$0xff]
    %v444 = vld [vmem:[#allocation8 + $0x170] sm:$0xff]
    %v445 = vld [vmem:[#allocation8 + $0x178] sm:$0xff]
    %v446 = vld [vmem:[#allocation8 + $0x180] sm:$0xff]
    %v447 = vld [vmem:[#allocation8 + $0x188] sm:$0xff]
    %v448 = vld [vmem:[#allocation8 + $0x190] sm:$0xff]
    %v449 = vld [vmem:[#allocation8 + $0x198] sm:$0xff]
    %v450 = vld [vmem:[#allocation8 + $0x1a0] sm:$0xff]
    %v451 = vld [vmem:[#allocation8 + $0x1a8] sm:$0xff]
    %v452 = vld [vmem:[#allocation8 + $0x1b0] sm:$0xff]
    %v453 = vld [vmem:[#allocation8 + $0x1b8] sm:$0xff]
    %v454 = vld [vmem:[#allocation8 + $0x1c0] sm:$0xff]
    %v455 = vld [vmem:[#allocation8 + $0x1c8] sm:$0xff]
    %v456 = vld [vmem:[#allocation8 + $0x1d0] sm:$0xff]
    %v457 = vld [vmem:[#allocation8 + $0x1d8] sm:$0xff]
    %v458 = vld [vmem:[#allocation8 + $0x1e0] sm:$0xff]
    %v459 = vld [vmem:[#allocation8 + $0x1e8] sm:$0xff]
    %v460 = vld [vmem:[#allocation8 + $0x1f0] sm:$0xff]
    %v461 = vld [vmem:[#allocation8 + $0x1f8] sm:$0xff]
    %v526 = vunpack.c.l.b16 %v398
    %v527 = vunpack.c.h.b16 %v398
    %v528 = vunpack.c.l.b16 %v399
    %v529 = vunpack.c.h.b16 %v399
    %v530 = vunpack.c.l.b16 %v400
    %v531 = vunpack.c.h.b16 %v400
    %v532 = vunpack.c.l.b16 %v401
    %v533 = vunpack.c.h.b16 %v401
    %v534 = vunpack.c.l.b16 %v402
    %v535 = vunpack.c.h.b16 %v402
    %v536 = vunpack.c.l.b16 %v403
    %v537 = vunpack.c.h.b16 %v403
    %v538 = vunpack.c.l.b16 %v404
    %v539 = vunpack.c.h.b16 %v404
    %v540 = vunpack.c.l.b16 %v405
    %v541 = vunpack.c.h.b16 %v405
    %v542 = vunpack.c.l.b16 %v406
    %v543 = vunpack.c.h.b16 %v406
    %v544 = vunpack.c.l.b16 %v407
    %v545 = vunpack.c.h.b16 %v407
    %v546 = vunpack.c.l.b16 %v408
    %v547 = vunpack.c.h.b16 %v408
    %v548 = vunpack.c.l.b16 %v409
    %v549 = vunpack.c.h.b16 %v409
    %v550 = vunpack.c.l.b16 %v410
    %v551 = vunpack.c.h.b16 %v410
    %v552 = vunpack.c.l.b16 %v411
    %v553 = vunpack.c.h.b16 %v411
    %v554 = vunpack.c.l.b16 %v412
    %v555 = vunpack.c.h.b16 %v412
    %v556 = vunpack.c.l.b16 %v413
    %v557 = vunpack.c.h.b16 %v413
    %v558 = vunpack.c.l.b16 %v414
    %v559 = vunpack.c.h.b16 %v414
    %v560 = vunpack.c.l.b16 %v415
    %v561 = vunpack.c.h.b16 %v415
    %v562 = vunpack.c.l.b16 %v416
    %v563 = vunpack.c.h.b16 %v416
    %v564 = vunpack.c.l.b16 %v417
    %v565 = vunpack.c.h.b16 %v417
    %v566 = vunpack.c.l.b16 %v418
    %v567 = vunpack.c.h.b16 %v418
    %v568 = vunpack.c.l.b16 %v419
    %v569 = vunpack.c.h.b16 %v419
    %v570 = vunpack.c.l.b16 %v420
    %v571 = vunpack.c.h.b16 %v420
    %v572 = vunpack.c.l.b16 %v421
    %v573 = vunpack.c.h.b16 %v421
    %v574 = vunpack.c.l.b16 %v422
    %v575 = vunpack.c.h.b16 %v422
    %v576 = vunpack.c.l.b16 %v423
    %v577 = vunpack.c.h.b16 %v423
    %v578 = vunpack.c.l.b16 %v424
    %v579 = vunpack.c.h.b16 %v424
    %v580 = vunpack.c.l.b16 %v425
    %v581 = vunpack.c.h.b16 %v425
    %v582 = vunpack.c.l.b16 %v426
    %v583 = vunpack.c.h.b16 %v426
    %v584 = vunpack.c.l.b16 %v427
    %v585 = vunpack.c.h.b16 %v427
    %v586 = vunpack.c.l.b16 %v428
    %v587 = vunpack.c.h.b16 %v428
    %v588 = vunpack.c.l.b16 %v429
    %v589 = vunpack.c.h.b16 %v429
    %v590 = vunpack.c.l.b16 %v430
    %v591 = vunpack.c.h.b16 %v430
    %v592 = vunpack.c.l.b16 %v431
    %v593 = vunpack.c.h.b16 %v431
    %v594 = vunpack.c.l.b16 %v432
    %v595 = vunpack.c.h.b16 %v432
    %v596 = vunpack.c.l.b16 %v433
    %v597 = vunpack.c.h.b16 %v433
    %v598 = vunpack.c.l.b16 %v434
    %v599 = vunpack.c.h.b16 %v434
    %v600 = vunpack.c.l.b16 %v435
    %v601 = vunpack.c.h.b16 %v435
    %v602 = vunpack.c.l.b16 %v436
    %v603 = vunpack.c.h.b16 %v436
    %v604 = vunpack.c.l.b16 %v437
    %v605 = vunpack.c.h.b16 %v437
    %v606 = vunpack.c.l.b16 %v438
    %v607 = vunpack.c.h.b16 %v438
    %v608 = vunpack.c.l.b16 %v439
    %v609 = vunpack.c.h.b16 %v439
    %v610 = vunpack.c.l.b16 %v440
    %v611 = vunpack.c.h.b16 %v440
    %v612 = vunpack.c.l.b16 %v441
    %v613 = vunpack.c.h.b16 %v441
    %v614 = vunpack.c.l.b16 %v442
    %v615 = vunpack.c.h.b16 %v442
    %v616 = vunpack.c.l.b16 %v443
    %v617 = vunpack.c.h.b16 %v443
    %v618 = vunpack.c.l.b16 %v444
    %v619 = vunpack.c.h.b16 %v444
    %v620 = vunpack.c.l.b16 %v445
    %v621 = vunpack.c.h.b16 %v445
    %v622 = vunpack.c.l.b16 %v446
    %v623 = vunpack.c.h.b16 %v446
    %v624 = vunpack.c.l.b16 %v447
    %v625 = vunpack.c.h.b16 %v447
    %v626 = vunpack.c.l.b16 %v448
    %v627 = vunpack.c.h.b16 %v448
    %v628 = vunpack.c.l.b16 %v449
    %v629 = vunpack.c.h.b16 %v449
    %v630 = vunpack.c.l.b16 %v450
    %v631 = vunpack.c.h.b16 %v450
    %v632 = vunpack.c.l.b16 %v451
    %v633 = vunpack.c.h.b16 %v451
    %v634 = vunpack.c.l.b16 %v452
    %v635 = vunpack.c.h.b16 %v452
    %v636 = vunpack.c.l.b16 %v453
    %v637 = vunpack.c.h.b16 %v453
    %v638 = vunpack.c.l.b16 %v454
    %v639 = vunpack.c.h.b16 %v454
    %v640 = vunpack.c.l.b16 %v455
    %v641 = vunpack.c.h.b16 %v455
    %v642 = vunpack.c.l.b16 %v456
    %v643 = vunpack.c.h.b16 %v456
    %v644 = vunpack.c.l.b16 %v457
    %v645 = vunpack.c.h.b16 %v457
    %v646 = vunpack.c.l.b16 %v458
    %v647 = vunpack.c.h.b16 %v458
    %v648 = vunpack.c.l.b16 %v459
    %v649 = vunpack.c.h.b16 %v459
    %v650 = vunpack.c.l.b16 %v460
    %v651 = vunpack.c.h.b16 %v460
    %v652 = vunpack.c.l.b16 %v461
    %v653 = vunpack.c.h.b16 %v461
    %v654 = vpack.c.b16 %v528, %v526
    %v655 = vpack.c.b16 %v529, %v527
    %v656 = vpack.c.b16 %v532, %v530
    %v657 = vpack.c.b16 %v533, %v531
    %v658 = vpack.c.b16 %v536, %v534
    %v659 = vpack.c.b16 %v537, %v535
    %v660 = vpack.c.b16 %v540, %v538
    %v661 = vpack.c.b16 %v541, %v539
    %v662 = vpack.c.b16 %v544, %v542
    %v663 = vpack.c.b16 %v545, %v543
    %v664 = vpack.c.b16 %v548, %v546
    %v665 = vpack.c.b16 %v549, %v547
    %v666 = vpack.c.b16 %v552, %v550
    %v667 = vpack.c.b16 %v553, %v551
    %v668 = vpack.c.b16 %v556, %v554
    %v669 = vpack.c.b16 %v557, %v555
    %v670 = vpack.c.b16 %v560, %v558
    %v671 = vpack.c.b16 %v561, %v559
    %v672 = vpack.c.b16 %v564, %v562
    %v673 = vpack.c.b16 %v565, %v563
    %v674 = vpack.c.b16 %v568, %v566
    %v675 = vpack.c.b16 %v569, %v567
    %v676 = vpack.c.b16 %v572, %v570
    %v677 = vpack.c.b16 %v573, %v571
    %v678 = vpack.c.b16 %v576, %v574
    %v679 = vpack.c.b16 %v577, %v575
    %v680 = vpack.c.b16 %v580, %v578
    %v681 = vpack.c.b16 %v581, %v579
    %v682 = vpack.c.b16 %v584, %v582
    %v683 = vpack.c.b16 %v585, %v583
    %v684 = vpack.c.b16 %v588, %v586
    %v685 = vpack.c.b16 %v589, %v587
    %v686 = vpack.c.b16 %v592, %v590
    %v687 = vpack.c.b16 %v593, %v591
    %v688 = vpack.c.b16 %v596, %v594
    %v689 = vpack.c.b16 %v597, %v595
    %v690 = vpack.c.b16 %v600, %v598
    %v691 = vpack.c.b16 %v601, %v599
    %v692 = vpack.c.b16 %v604, %v602
    %v693 = vpack.c.b16 %v605, %v603
    %v694 = vpack.c.b16 %v608, %v606
    %v695 = vpack.c.b16 %v609, %v607
    %v696 = vpack.c.b16 %v612, %v610
    %v697 = vpack.c.b16 %v613, %v611
    %v698 = vpack.c.b16 %v616, %v614
    %v699 = vpack.c.b16 %v617, %v615
    %v700 = vpack.c.b16 %v620, %v618
    %v701 = vpack.c.b16 %v621, %v619
    %v702 = vpack.c.b16 %v624, %v622
    %v703 = vpack.c.b16 %v625, %v623
    %v704 = vpack.c.b16 %v628, %v626
    %v705 = vpack.c.b16 %v629, %v627
    %v706 = vpack.c.b16 %v632, %v630
    %v707 = vpack.c.b16 %v633, %v631
    %v708 = vpack.c.b16 %v636, %v634
    %v709 = vpack.c.b16 %v637, %v635
    %v710 = vpack.c.b16 %v640, %v638
    %v711 = vpack.c.b16 %v641, %v639
    %v712 = vpack.c.b16 %v644, %v642
    %v713 = vpack.c.b16 %v645, %v643
    %v714 = vpack.c.b16 %v648, %v646
    %v715 = vpack.c.b16 %v649, %v647
    %v716 = vpack.c.b16 %v652, %v650
    %v717 = vpack.c.b16 %v653, %v651
    %782 = vmatprep.subr.bf16.mxu0 %v669
    %783 = vmatpush1.bf16.msra.mxu0 %v668
    %784 = vmatprep.subr.bf16.mxu0 %v667
    %785 = vmatpush1.bf16.msra.mxu0 %v666
    %786 = vmatprep.subr.bf16.mxu0 %v665
    %787 = vmatpush1.bf16.msra.mxu0 %v664
    %788 = vmatprep.subr.bf16.mxu0 %v663
    %789 = vmatpush1.bf16.msra.mxu0 %v662
    %790 = vmatprep.subr.bf16.mxu0 %v661
    %791 = vmatpush1.bf16.msra.mxu0 %v660
    %792 = vmatprep.subr.bf16.mxu0 %v659
    %793 = vmatpush1.bf16.msra.mxu0 %v658
    %794 = vmatprep.subr.bf16.mxu0 %v657
    %795 = vmatpush1.bf16.msra.mxu0 %v656
    %796 = vmatprep.subr.bf16.mxu0 %v655
    %797 = vmatpush1.bf16.msra.mxu0 %v654
    %798 = vmatprep.subr.bf16.mxu0 %v685
    %799 = vmatpush2.bf16.msra.mxu0 %v684
    %800 = vmatprep.subr.bf16.mxu0 %v683
    %801 = vmatpush2.bf16.msra.mxu0 %v682
    %802 = vmatprep.subr.bf16.mxu0 %v681
    %803 = vmatpush2.bf16.msra.mxu0 %v680
    %804 = vmatprep.subr.bf16.mxu0 %v679
    %805 = vmatpush2.bf16.msra.mxu0 %v678
    %806 = vmatprep.subr.bf16.mxu0 %v677
    %807 = vmatpush2.bf16.msra.mxu0 %v676
    %808 = vmatprep.subr.bf16.mxu0 %v675
    %809 = vmatpush2.bf16.msra.mxu0 %v674
    %810 = vmatprep.subr.bf16.mxu0 %v673
    %811 = vmatpush2.bf16.msra.mxu0 %v672
    %812 = vmatprep.subr.bf16.mxu0 %v671
    %813 = vmatpush2.bf16.msra.mxu0 %v670
    %814 = vmatprep.mubr.bf16.mxu0 %v393
    %815 = vmatmul.mubr.bf16.gmra.mxu0 %v392
    %v816 = vpop.f32.mrf.mxu0
    %v817 = vadd.f32 0.0, %v816
    %v818 = vpop.f32.mrf.mxu0
    %v819 = vadd.f32 0.0, %v818
    %v820 = vpop.f32.mrf.mxu0
    %v821 = vpop.f32.mrf.mxu0
    %822 = vdwg.mxu0
    %823 = vmatprep.subr.bf16.mxu0 %v701
    %824 = vmatpush1.bf16.msra.mxu0 %v700
    %825 = vmatprep.subr.bf16.mxu0 %v699
    %826 = vmatpush1.bf16.msra.mxu0 %v698
    %827 = vmatprep.subr.bf16.mxu0 %v697
    %828 = vmatpush1.bf16.msra.mxu0 %v696
    %829 = vmatprep.subr.bf16.mxu0 %v695
    %830 = vmatpush1.bf16.msra.mxu0 %v694
    %831 = vmatprep.subr.bf16.mxu0 %v693
    %832 = vmatpush1.bf16.msra.mxu0 %v692
    %833 = vmatprep.subr.bf16.mxu0 %v691
    %834 = vmatpush1.bf16.msra.mxu0 %v690
    %835 = vmatprep.subr.bf16.mxu0 %v689
    %836 = vmatpush1.bf16.msra.mxu0 %v688
    %837 = vmatprep.subr.bf16.mxu0 %v687
    %838 = vmatpush1.bf16.msra.mxu0 %v686
    %839 = vmatprep.subr.bf16.mxu0 %v717
    %840 = vmatpush2.bf16.msra.mxu0 %v716
    %841 = vmatprep.subr.bf16.mxu0 %v715
    %842 = vmatpush2.bf16.msra.mxu0 %v714
    %843 = vmatprep.subr.bf16.mxu0 %v713
    %844 = vmatpush2.bf16.msra.mxu0 %v712
    %845 = vmatprep.subr.bf16.mxu0 %v711
    %846 = vmatpush2.bf16.msra.mxu0 %v710
    %847 = vmatprep.subr.bf16.mxu0 %v709
    %848 = vmatpush2.bf16.msra.mxu0 %v708
    %849 = vmatprep.subr.bf16.mxu0 %v707
    %850 = vmatpush2.bf16.msra.mxu0 %v706
    %851 = vmatprep.subr.bf16.mxu0 %v705
    %852 = vmatpush2.bf16.msra.mxu0 %v704
    %853 = vmatprep.subr.bf16.mxu0 %v703
    %854 = vmatpush2.bf16.msra.mxu0 %v702
    %855 = vmatprep.mubr.bf16.mxu0 %v395
    %856 = vmatmul.mubr.bf16.gmra.mxu0 %v394
    %v857 = vpop.f32.mrf.mxu0
    %v858 = vadd.f32 %v817, %v857
    %v859 = vpop.f32.mrf.mxu0
    %v860 = vadd.f32 %v819, %v859
    %v861 = vpop.f32.mrf.mxu0
    %v862 = vpop.f32.mrf.mxu0
    %863 = vdwg.mxu0
    %v864 = vadd.f32 %v396, %v858
    %v865 = vadd.f32 %v397, %v860
    %866 = vst [vmem:[#allocation10] sm:$0xff] %v864
    %867 = vst [vmem:[#allocation10 + $0x8] sm:$0xff] %v865
    // Predicated region
    $region42: #{tpu_custom_call.1} parent=1 // pred_check
      _
    $region43: #{tpu_custom_call.1} parent=1 // pred_check_branch
      %869 = sbr.rel (0) target = $region45
    $region44: #{tpu_custom_call.1} parent=1 // pred_region
      %s871 = ssub.s32 256, 256
      %872 = vsyncadd [#allocation4], %s871
      %s874 = sshll.u32 [#allocation10], 4
      %s875 = int_to_ptr.vmem [resolvable:$true] %s874
      %877 = dma.vmem_to_hbm [thread:$0]  %s875, 256, %s5, [#allocation4]
    $region45: #{tpu_custom_call.1} parent=1 // pred_fallthru
      _
    // Predicated region
    $region46: #{tpu_custom_call.1} parent=1 // pred_check
      _
    $region47: #{tpu_custom_call.1} parent=1 // pred_check_branch
      %879 = sbr.rel (0) target = $region49
    $region48: #{tpu_custom_call.1} parent=1 // pred_region
      %880 = dma.done [#allocation4], 256
    $region49: #{tpu_custom_call.1} parent=1 // pred_fallthru
      _
    %881 = vsyncpa [#allocation3], 1
    %882 = vsyncpa [#allocation6], 1
    %883 = vsyncpa [#allocation9], 1
    %884 = vsyncpa [#allocation4], 1

</llo_original>
